<compile_context>
chip_gen: v5e
topology: v5e:2x2
jax: 0.10.0
libtpu: 0.0.40
codegen_flags: <defaults>
</compile_context>

<pallas_src>
import jax
import jax.numpy as jnp
from jax.experimental import pallas as pl
from jax.experimental.pallas import tpu as pltpu


def _relayout_kernel(dv_ref, out_ref):
    """dv_ref: (B, TT, D) block  ->  out_ref: (TT, B*D) lane-dense block."""
    B = dv_ref.shape[0]
    # Static unroll over the tiny batch dim; a lane-axis concat keeps the
    # minor dim untouched (no cross-sublane transpose / relayout needed).
    parts = [dv_ref[b] for b in range(B)]            # each (TT, D)
    out_ref[...] = jnp.concatenate(parts, axis=-1)   # (TT, B*D)


def _build_fused_relayout(B, T, D, dtype):
    """One pallas_call for the whole trajectory: (B, T, D) -> (T, B*D)."""
    TT = T if T < 8 else 8              # pack 8 time steps per output tile
    grid = (pl.cdiv(T, TT),)
    return pl.pallas_call(
        _relayout_kernel,
        out_shape=jax.ShapeDtypeStruct((T, B * D), dtype),
        grid=grid,
        in_specs=[pl.BlockSpec((B, TT, D), lambda t: (0, t, 0))],
        out_specs=pl.BlockSpec((TT, B * D), lambda t: (t, 0)),
        compiler_params=pltpu.CompilerParams(
            dimension_semantics=("parallel",),   # v7x megacore can split T
        ),
    )


def _build_select(B, T, D):
    """Per-call path: one jitted dispatch, device-resident step counter."""
    def select(flat, step):
        idx = jnp.minimum(step, T - 1)                        # over-call guard
        row = jax.lax.dynamic_slice_in_dim(flat, idx, 1, 0)   # (1, B*D)
        return row.reshape(B, 1, D), step + jnp.int32(1)
    # Donate the counter buffer: the incremented counter reuses it in place.
    return jax.jit(select, donate_argnums=(1,))


class AUVRNNDeltaVProxy:
    """JAX/Pallas port of the PyTorch proxy.

    dv is given in PyTorch layout (B, T, D).  Each call returns
    (dv[:, i-1:i], None) with i incrementing per call; x, v, a, h0 are
    ignored, exactly like the PyTorch module.
    """

    def __init__(self, dv):
        dv = jnp.asarray(dv)
        assert dv.ndim == 3, "dv expected as (B, T, D)"
        self._B, self._T, self._D = dv.shape
        # Single fused Pallas launch for the whole rollout (layout transform
        # to time-major, lane-contiguous rows).
        self._flat = _build_fused_relayout(
            self._B, self._T, self._D, dv.dtype)(dv)          # (T, B*D)
        self._select = _build_select(self._B, self._T, self._D)
        self._step = jnp.zeros((), jnp.int32)   # device-resident counter
        self.i = 0                              # PyTorch-compatible counter

    def __call__(self, x, v, a, h0=None):
        del x, v, a, h0                         # ignored, per the spec
        self.i += 1
        out, self._step = self._select(self._flat, self._step)
        return out, None                        # (B, 1, D), None


if __name__ == "__main__":
    key = jax.random.PRNGKey(0)
    B, T, D = 2, 8, 6            # batch, trajectory length, delta-v dim (6 DoF)

    k_dv, k_x, k_v, k_a = jax.random.split(key, 4)
    dv = jax.random.normal(k_dv, (B, T, D), dtype=jnp.float32)

    # Ignored inputs (shapes only need to be plausible for the AUV model).
    x = jax.random.normal(k_x, (B, T, 7), dtype=jnp.float32)   # pose history
    v = jax.random.normal(k_v, (B, T, 6), dtype=jnp.float32)   # velocity history
    a = jax.random.normal(k_a, (B, T, 6), dtype=jnp.float32)   # action history

    proxy = AUVRNNDeltaVProxy(dv)
    jax.block_until_ready(proxy._flat)   # the fused Pallas kernel ran once here

    ok = True
    for _ in range(3):  # exercise the stateful counter, like repeated forwards
        out, h = proxy(x, v, a)
        out = jax.block_until_ready(out)
        ref = dv[:, proxy.i - 1:proxy.i]                 # PyTorch semantics
        ok &= (h is None)
        ok &= out.shape == (B, 1, D)
        ok &= bool(jnp.array_equal(out, ref))

    if ok:
        print("KERNEL_OK")
    else:
        print("KERNEL_MISMATCH")
</pallas_src>

<mosaic_0001>
module attributes {stable_mosaic.version = 11 : i64} {
  func.func @_relayout_kernel(%arg0: i32, %arg1: memref<2x8x6xf32, #tpu.memory_space<vmem>>, %arg2: memref<8x12xf32, #tpu.memory_space<vmem>>) attributes {dimension_semantics = [#tpu.dimension_semantics<parallel>], iteration_bounds = array<i64: 1>, scalar_prefetch = 0 : i64, scratch_operands = 0 : i64, tpu.core_type = #tpu.core_type<tc>, window_params = [{transform_indices = @transform_0, window_bounds = array<i64: 2, 8, 6>}, {transform_indices = @transform_1, window_bounds = array<i64: 8, 12>}]} {
    %c0 = arith.constant 0 : index
    %c0_0 = arith.constant 0 : index
    %c0_1 = arith.constant 0 : index
    %0 = vector.load %arg1[%c0, %c0_0, %c0_1] : memref<2x8x6xf32, #tpu.memory_space<vmem>>, vector<1x8x6xf32>
    %1 = vector.shape_cast %0 : vector<1x8x6xf32> to vector<8x6xf32>
    %c1 = arith.constant 1 : index
    %c0_2 = arith.constant 0 : index
    %c0_3 = arith.constant 0 : index
    %2 = vector.load %arg1[%c1, %c0_2, %c0_3] : memref<2x8x6xf32, #tpu.memory_space<vmem>>, vector<1x8x6xf32>
    %3 = vector.shape_cast %2 : vector<1x8x6xf32> to vector<8x6xf32>
    %4 = tpu.concatenate %1, %3 in 1 : vector<8x6xf32>, vector<8x6xf32> -> vector<8x12xf32>
    %c0_4 = arith.constant 0 : index
    %c0_5 = arith.constant 0 : index
    %5 = vector.load %arg2[%c0_4, %c0_5] : memref<8x12xf32, #tpu.memory_space<vmem>>, vector<8x12xf32>
    tpu.vector_store %arg2[%c0_4, %c0_5], %4 {strides = array<i32>} : memref<8x12xf32, #tpu.memory_space<vmem>>, vector<8x12xf32>,
    return
  }
  func.func @transform_0(%arg0: i32) -> (i32, i32, i32) {
    %c0_i32 = arith.constant 0 : i32
    %c0_i32_0 = arith.constant 0 : i32
    %c0_i32_1 = arith.constant 0 : i32
    return %c0_i32, %arg0, %c0_i32_0 : i32, i32, i32
  }
  func.func @transform_1(%arg0: i32) -> (i32, i32) {
    %c0_i32 = arith.constant 0 : i32
    %c0_i32_0 = arith.constant 0 : i32
    return %arg0, %c0_i32 : i32, i32
  }
}

</mosaic_0001>

<llo_original>
// kernel: tpu_custom_call.1
$region0: #{tpu_custom_call.1}
  #allocation0 [shape = 'u32[]', space=smem, size = 0x4, offset = 0x4, fixed_abs, tag = 'smem constant byte address 0x4 - core index']
  #allocation1 [shape = 'u32[72,128]{1,0:T(1,128)}', space=vmem, size = 0x9000, scoped, tag = 'internal scratch']
  %s0 = inlined_call_operand.vmem [shape: f32[2,8,6], index: 0, kind: input, shape index: {}]
  %s1 = inlined_call_operand.hbm [shape: f32[8,12], index: 1, kind: output, shape index: {}]
  %s2 = sld [smem:[#allocation0]]
  $region14: #{tpu_custom_call.1} parent=0
    _
  %s4 = ssub.s32 1, %s2
  %s5 = scalar_select 0, %s4, %s2
  $region1: #{tpu_custom_call.1} parent=0
    #allocation2 [shape = 'u8[4096]{0}', space=vmem, size = 0x1000, scoped, tag = 'output window, operand 0, single buffered']
    #allocation3 [shape = 's32[1]{0}', space=sflag, size = 0x4, scoped, tag = 'scoped memory for tpu_custom_call.1']
    %6 = vsyncpa [#allocation3], 0
    // Predicated region
    $region2: #{tpu_custom_call.1} parent=1 // pred_check
      _
    $region3: #{tpu_custom_call.1} parent=1 // pred_check_branch
      %8 = sbr.rel (0) target = $region5
    $region4: #{tpu_custom_call.1} parent=1 // pred_region
      _
    $region5: #{tpu_custom_call.1} parent=1 // pred_fallthru
      _
    %v9 = vld [vmem:[%s0] sm:$0xff]
    %s10 = scalar_lea.vmem %s0, 8
    %v11 = vld [vmem:[%s10] sm:$0xff]
    %13 = vrot.lane.b32.xlu0 %v11, 6
    %v14 = vpop.permute.xlu0 %13
    %vm16 = vcmask 48128
    %v17 = vsel %vm16, %v9, %v14
    %vm18 = vcmask 97280
    %19 = vst.msk [vmem:[#allocation2] sm:$0xff] %vm18, %v17
    // Predicated region
    $region6: #{tpu_custom_call.1} parent=1 // pred_check
      _
    $region7: #{tpu_custom_call.1} parent=1 // pred_check_branch
      %21 = sbr.rel (0) target = $region9
    $region8: #{tpu_custom_call.1} parent=1 // pred_region
      %23 = vsyncadd [#allocation3], 0
      %s25 = sshll.u32 [#allocation2], 4
      %s26 = int_to_ptr.vmem [resolvable:$true] %s25
      %s27 = sshll.u32 %s1, 4
      %s28 = int_to_ptr.hbm [resolvable:$true] %s27
      %30 = dma.vmem_to_hbm [thread:$0]  %s26, 128, %s28, [#allocation3]
    $region9: #{tpu_custom_call.1} parent=1 // pred_fallthru
      _
    // Predicated region
    $region10: #{tpu_custom_call.1} parent=1 // pred_check
      _
    $region11: #{tpu_custom_call.1} parent=1 // pred_check_branch
      %32 = sbr.rel (0) target = $region13
    $region12: #{tpu_custom_call.1} parent=1 // pred_region
      %34 = dma.done [#allocation3], 128
    $region13: #{tpu_custom_call.1} parent=1 // pred_fallthru
      _
    %35 = vsyncpa [#allocation3], 1

</llo_original>
